<compile_context>
chip_gen: v5e
topology: v5e:2x2
jax: 0.10.0
libtpu: 0.0.40
codegen_flags: <defaults>
</compile_context>

<pallas_src>
import jax
import jax.numpy as jnp
import numpy as np
from jax import lax
from jax.experimental import pallas as pl
from jax.experimental.pallas import tpu as pltpu


# ---------------------------------------------------------------------------
# Fused embedding-gather + GRU kernel (single grid step, everything in VMEM)
# ---------------------------------------------------------------------------
def encoder_gru_kernel(ids_ref, gtbl_ref, whh_ref, bhn3_ref, out_ref):
    """Fused one-hot embedding/input-gate gather + single-layer GRU recurrence.

    ids_ref   : (T*B, 1) int32   time-major flattened token ids
    gtbl_ref  : (Vp, 3H) f32     precomputed  emb @ W_ih + b_ih + [b_hr,b_hz,0]
    whh_ref   : (H, 3H)  f32     hidden->gate weights, gate order (r, z, n)
    bhn3_ref  : (1, 3H)  f32     [0, 0, b_hn]  (b_hn must stay inside r*(.))
    out_ref   : (T, B, H) f32    time-major hidden states
    """
    TB = ids_ref.shape[0]
    Vp = gtbl_ref.shape[0]
    T, B, H = out_ref.shape

    # ---- one-hot gather on the MXU: fuses embedding lookup + input-side gate
    # projection into a single (T*B, Vp) @ (Vp, 3H) matmul.  All input-side
    # work is hoisted off the serial recurrence (cuDNN-style).
    # TODO(synk): for large vocabularies (V >~ few thousand) this one-hot /
    # table-resident design exceeds v7x's scoped-VMEM default; switch to a
    # scalar-prefetched (num_scalar_prefetch=1) pl.Element row-gather over the
    # gate table, or gather with jnp.take in the wrapper.
    ids = ids_ref[...]                                              # (T*B, 1)
    vocab_iota = lax.broadcasted_iota(jnp.int32, (TB, Vp), 1)
    onehot = (ids == vocab_iota).astype(jnp.float32)                # (T*B, Vp)
    gates_i = jnp.dot(onehot, gtbl_ref[...],
                      preferred_element_type=jnp.float32)           # (T*B, 3H)

    w_hh = whh_ref[...]        # (H, 3H) — read once; loop-invariant MXU RHS
    b_hn3 = bhn3_ref[...]      # (1, 3H) = [0, 0, b_hn]

    # ---- serial recurrence: only  h @ W_hh  + gate math on the critical path
    # NOTE(perf): review suggests pltpu.matmul_push_rhs/acc_lhs/pop to keep
    # W_hh stationary across the 8 steps; kept as jnp.dot for guaranteed
    # correct lowering at these sub-tile shapes (see header comment).
    # At larger B*T, spill gates_i to a VMEM scratch and pad 3H -> 128 lanes
    # so the per-step stores are unmasked (lane-dense) vst.
    h = jnp.zeros((B, H), jnp.float32)
    for t in range(T):                    # fully unrolled, T is static & small
        g_i = gates_i[t * B:(t + 1) * B, :]                          # (B, 3H)
        # hidden-side gates; [0,0,b_hn] folded in with one full-width VPU add
        g_h = jnp.dot(h, w_hh, preferred_element_type=jnp.float32) + b_hn3
        # single full-width pre-activation add; r|z share one sigmoid (EUP)
        s = g_i + g_h                                                # (B, 3H)
        rz = jax.nn.sigmoid(s[:, :2 * H])                            # (B, 2H)
        r = rz[:, :H]
        z = rz[:, H:]
        # n-gate: b_hn (inside g_h's n slice) is multiplied by r, as required
        n = jnp.tanh(g_i[:, 2 * H:] + r * g_h[:, 2 * H:])            # (B, H)
        h = n + z * (h - n)                        # == (1 - z) * n + z * h
        out_ref[t] = h


def encoder_gru(input_var, embedding, w_ih, w_hh, b_ih, b_hh):
    """input_var: (B, T) int32 token ids.
    Returns (output (B, T, H), hidden (1, B, H)) — PyTorch batch_first GRU."""
    B, T = input_var.shape
    V, E = embedding.shape
    H = w_hh.shape[0]
    G = 3 * H

    # ---- tiny wrapper-side transforms (weight-only work hoisted here so XLA
    # can CSE/hoist it across calls with fixed weights):
    # time-major flattened ids so the kernel slices (B, 3H) rows per step.
    ids_tm = jnp.transpose(input_var).reshape(T * B, 1).astype(jnp.int32)

    # pad vocab rows to a multiple of 8 (sublane-friendly); padded rows are
    # never selected (ids < V) so their bias-only content is inert.
    Vp = ((V + 7) // 8) * 8
    emb_p = embedding if Vp == V else jnp.pad(embedding, ((0, Vp - V), (0, 0)))

    # gate_tbl[v] = emb[v] @ W_ih + b_ih + [b_hr, b_hz, 0]      (Vp, 3H)
    b_fold = b_ih + jnp.concatenate(
        [b_hh[:, :2 * H], jnp.zeros((1, H), jnp.float32)], axis=1)
    gate_tbl = (emb_p @ w_ih + b_fold).astype(jnp.float32)

    # b_hn kept separate (must sit inside r*(.)), padded to full gate width so
    # the kernel folds it in with a single full-width add.
    b_hn3 = jnp.concatenate(
        [jnp.zeros((1, 2 * H), jnp.float32), b_hh[:, 2 * H:]], axis=1)  # (1,3H)

    # TODO(synk): if B is scaled up on v7x, add a leading grid axis of size 2
    # marked "parallel" slicing ids/gate rows/output by B/2 per TensorCore;
    # the time recurrence stays inside each core.  Not worth it at B=8.
    grid_spec = pltpu.PrefetchScalarGridSpec(
        num_scalar_prefetch=0,
        grid=(1,),   # single grid step: whole problem resident in VMEM
        in_specs=[
            pl.BlockSpec((T * B, 1), lambda i: (0, 0)),   # ids (time-major)
            pl.BlockSpec((Vp, G), lambda i: (0, 0)),      # precomputed gate table
            pl.BlockSpec((H, G), lambda i: (0, 0)),       # W_hh (H, 3H)
            pl.BlockSpec((1, G), lambda i: (0, 0)),       # [0, 0, b_hn]
        ],
        out_specs=pl.BlockSpec((T, B, H), lambda i: (0, 0, 0)),
    )

    out_tbh = pl.pallas_call(
        encoder_gru_kernel,
        out_shape=jax.ShapeDtypeStruct((T, B, H), jnp.float32),
        grid_spec=grid_spec,
        compiler_params=pltpu.CompilerParams(
            dimension_semantics=("arbitrary",),
        ),
    )(ids_tm, gate_tbl, w_hh, b_hn3)

    output = jnp.transpose(out_tbh, (1, 0, 2))     # (B, T, H) batch_first
    hidden = out_tbh[T - 1][None, :, :]            # (1, B, H) = h_T
    return output, hidden


# ---------------------------------------------------------------------------
# Encoder module equivalent
# ---------------------------------------------------------------------------
class EncoderPallas:
    """Pallas equivalent of the PyTorch Encoder (GRU, n_layers=1, batch_first).

    input_dropout_p=0 and dropout_p=0 => dropout is identity.
    variable_lengths=False path only.
    """

    def __init__(self, vocab_size, embed_size, hidden_size, key):
        self.vocab_size = vocab_size
        self.embed_size = embed_size
        self.hidden_size = hidden_size
        k = jax.random.split(key, 5)
        bound = 1.0 / np.sqrt(hidden_size)
        # nn.Embedding default init: N(0, 1)
        self.embedding = jax.random.normal(k[0], (vocab_size, embed_size),
                                           dtype=jnp.float32)
        # GRU params, PyTorch gate order (r, z, n), stored concatenated along
        # the gate axis and pre-transposed so the kernel computes x @ W.
        self.w_ih = jax.random.uniform(k[1], (embed_size, 3 * hidden_size),
                                       minval=-bound, maxval=bound,
                                       dtype=jnp.float32)
        self.w_hh = jax.random.uniform(k[2], (hidden_size, 3 * hidden_size),
                                       minval=-bound, maxval=bound,
                                       dtype=jnp.float32)
        self.b_ih = jax.random.uniform(k[3], (1, 3 * hidden_size),
                                       minval=-bound, maxval=bound,
                                       dtype=jnp.float32)
        self.b_hh = jax.random.uniform(k[4], (1, 3 * hidden_size),
                                       minval=-bound, maxval=bound,
                                       dtype=jnp.float32)

    def __call__(self, input_var):
        # TODO(synk): input_dropout / inter-layer dropout are identity (p=0);
        # a nonzero rate would need pltpu.prng_* masking. variable_lengths /
        # pack_padded_sequence is not implemented (no clean Pallas equivalent).
        return encoder_gru(input_var, self.embedding, self.w_ih, self.w_hh,
                           self.b_ih, self.b_hh)


# ---------------------------------------------------------------------------
# Pure-JAX reference (lax.scan GRU, standard un-folded formulation)
# ---------------------------------------------------------------------------
def reference_forward(enc, input_var):
    embedded = jnp.take(enc.embedding, input_var, axis=0)   # (B, T, E)
    B, T, _ = embedded.shape
    H = enc.hidden_size

    def step(h, x):
        gi = x @ enc.w_ih + enc.b_ih         # (B, 3H)
        gh = h @ enc.w_hh + enc.b_hh         # (B, 3H)
        r = jax.nn.sigmoid(gi[:, :H] + gh[:, :H])
        z = jax.nn.sigmoid(gi[:, H:2 * H] + gh[:, H:2 * H])
        n = jnp.tanh(gi[:, 2 * H:] + r * gh[:, 2 * H:])
        h_new = (1.0 - z) * n + z * h
        return h_new, h_new

    h0 = jnp.zeros((B, H), jnp.float32)
    xs = jnp.transpose(embedded, (1, 0, 2))   # (T, B, E)
    h_last, outs = lax.scan(step, h0, xs)
    return jnp.transpose(outs, (1, 0, 2)), h_last[None]


if __name__ == "__main__":
    vocab_size, embed_size, hidden_size = 50, 32, 32
    batch, seq_len = 8, 8

    key = jax.random.PRNGKey(0)
    k_param, k_tok = jax.random.split(key)
    enc = EncoderPallas(vocab_size, embed_size, hidden_size, k_param)

    input_var = jax.random.randint(k_tok, (batch, seq_len), 0, vocab_size,
                                   dtype=jnp.int32)

    output, hidden = enc(input_var)
    jax.block_until_ready((output, hidden))

    ref_out, ref_hid = reference_forward(enc, input_var)
    assert output.shape == (batch, seq_len, hidden_size)
    assert hidden.shape == (1, batch, hidden_size)
    np.testing.assert_allclose(np.asarray(output), np.asarray(ref_out),
                               rtol=1e-4, atol=1e-4)
    np.testing.assert_allclose(np.asarray(hidden), np.asarray(ref_hid),
                               rtol=1e-4, atol=1e-4)

    print("KERNEL_OK")
</pallas_src>

<mosaic_0001>
module attributes {stable_mosaic.version = 11 : i64} {
  func.func @encoder_gru_kernel(%arg0: i32, %arg1: memref<64x1xi32, #tpu.memory_space<vmem>>, %arg2: memref<56x96xf32, #tpu.memory_space<vmem>>, %arg3: memref<32x96xf32, #tpu.memory_space<vmem>>, %arg4: memref<1x96xf32, #tpu.memory_space<vmem>>, %arg5: memref<8x8x32xf32, #tpu.memory_space<vmem>>) attributes {dimension_semantics = [#tpu.dimension_semantics<arbitrary>], iteration_bounds = array<i64: 1>, scalar_prefetch = 0 : i64, scratch_operands = 0 : i64, tpu.core_type = #tpu.core_type<tc>, window_params = [{pipeline_mode = #tpu.pipeline_mode<synchronous>, transform_indices = @transform_0, window_bounds = array<i64: 64, 1>}, {pipeline_mode = #tpu.pipeline_mode<synchronous>, transform_indices = @transform_1, window_bounds = array<i64: 56, 96>}, {pipeline_mode = #tpu.pipeline_mode<synchronous>, transform_indices = @transform_2, window_bounds = array<i64: 32, 96>}, {pipeline_mode = #tpu.pipeline_mode<synchronous>, transform_indices = @transform_3, window_bounds = array<i64: 1, 96>}, {pipeline_mode = #tpu.pipeline_mode<synchronous>, transform_indices = @transform_4, window_bounds = array<i64: 8, 8, 32>}]} {
    %c0 = arith.constant 0 : index
    %c0_0 = arith.constant 0 : index
    %0 = vector.load %arg1[%c0, %c0_0] : memref<64x1xi32, #tpu.memory_space<vmem>>, vector<64x1xi32>
    %1 = tpu.iota {dimensions = array<i32: 1>} : vector<64x56xi32>
    %2 = vector.broadcast %0 : vector<64x1xi32> to vector<64x56xi32>
    %3 = arith.cmpi eq, %2, %1 : vector<64x56xi32>
    %4 = arith.extui %3 : vector<64x56xi1> to vector<64x56xi32>
    %5 = arith.sitofp %4 : vector<64x56xi32> to vector<64x56xf32>
    %c0_1 = arith.constant 0 : index
    %c0_2 = arith.constant 0 : index
    %6 = vector.load %arg2[%c0_1, %c0_2] : memref<56x96xf32, #tpu.memory_space<vmem>>, vector<56x96xf32>
    %cst = arith.constant dense<0.000000e+00> : vector<64x96xf32>
    %7 = tpu.matmul %5, %6, %cst {dimension_numbers = #tpu.dot_dimension_numbers<[1], [0], [0], [1], [0, 0, 1, 1], [], []>} : vector<64x56xf32>, vector<56x96xf32>, vector<64x96xf32> -> vector<64x96xf32>
    %c0_3 = arith.constant 0 : index
    %c0_4 = arith.constant 0 : index
    %8 = vector.load %arg3[%c0_3, %c0_4] : memref<32x96xf32, #tpu.memory_space<vmem>>, vector<32x96xf32>
    %c0_5 = arith.constant 0 : index
    %c0_6 = arith.constant 0 : index
    %9 = vector.load %arg4[%c0_5, %c0_6] : memref<1x96xf32, #tpu.memory_space<vmem>>, vector<1x96xf32>
    %cst_7 = arith.constant 0.000000e+00 : f32
    %10 = vector.broadcast %cst_7 : f32 to vector<8x32xf32>
    %11 = vector.extract_strided_slice %7 {offsets = [0, 0], sizes = [8, 96], strides = [1, 1]} : vector<64x96xf32> to vector<8x96xf32>
    %cst_8 = arith.constant dense<0.000000e+00> : vector<8x96xf32>
    %12 = tpu.matmul %10, %8, %cst_8 {dimension_numbers = #tpu.dot_dimension_numbers<[1], [0], [0], [1], [0, 0, 1, 1], [], []>} : vector<8x32xf32>, vector<32x96xf32>, vector<8x96xf32> -> vector<8x96xf32>
    %13 = vector.broadcast %9 : vector<1x96xf32> to vector<8x96xf32>
    %14 = arith.addf %12, %13 : vector<8x96xf32>
    %15 = arith.addf %11, %14 : vector<8x96xf32>
    %16 = vector.extract_strided_slice %15 {offsets = [0, 0], sizes = [8, 64], strides = [1, 1]} : vector<8x96xf32> to vector<8x64xf32>
    %17 = arith.negf %16 : vector<8x64xf32>
    %18 = math.exp %17 : vector<8x64xf32>
    %cst_9 = arith.constant 1.000000e+00 : f32
    %19 = vector.broadcast %cst_9 : f32 to vector<8x64xf32>
    %20 = arith.addf %19, %18 : vector<8x64xf32>
    %21 = arith.divf %19, %20 : vector<8x64xf32>
    %22 = vector.extract_strided_slice %21 {offsets = [0, 0], sizes = [8, 32], strides = [1, 1]} : vector<8x64xf32> to vector<8x32xf32>
    %23 = vector.extract_strided_slice %21 {offsets = [0, 32], sizes = [8, 32], strides = [1, 1]} : vector<8x64xf32> to vector<8x32xf32>
    %24 = vector.extract_strided_slice %11 {offsets = [0, 64], sizes = [8, 32], strides = [1, 1]} : vector<8x96xf32> to vector<8x32xf32>
    %25 = vector.extract_strided_slice %14 {offsets = [0, 64], sizes = [8, 32], strides = [1, 1]} : vector<8x96xf32> to vector<8x32xf32>
    %26 = arith.mulf %22, %25 : vector<8x32xf32>
    %27 = arith.addf %24, %26 : vector<8x32xf32>
    %28 = math.tanh %27 : vector<8x32xf32>
    %29 = arith.subf %10, %28 : vector<8x32xf32>
    %30 = arith.mulf %23, %29 : vector<8x32xf32>
    %31 = arith.addf %28, %30 : vector<8x32xf32>
    %c0_10 = arith.constant 0 : index
    %c0_11 = arith.constant 0 : index
    %c0_12 = arith.constant 0 : index
    %32 = vector.load %arg5[%c0_10, %c0_11, %c0_12] : memref<8x8x32xf32, #tpu.memory_space<vmem>>, vector<1x8x32xf32>
    %33 = vector.shape_cast %32 : vector<1x8x32xf32> to vector<8x32xf32>
    %34 = vector.shape_cast %31 : vector<8x32xf32> to vector<1x8x32xf32>
    tpu.vector_store %arg5[%c0_10, %c0_11, %c0_12], %34 {strides = array<i32>} : memref<8x8x32xf32, #tpu.memory_space<vmem>>, vector<1x8x32xf32>,
    %35 = vector.extract_strided_slice %7 {offsets = [8, 0], sizes = [8, 96], strides = [1, 1]} : vector<64x96xf32> to vector<8x96xf32>
    %cst_13 = arith.constant dense<0.000000e+00> : vector<8x96xf32>
    %36 = tpu.matmul %31, %8, %cst_13 {dimension_numbers = #tpu.dot_dimension_numbers<[1], [0], [0], [1], [0, 0, 1, 1], [], []>} : vector<8x32xf32>, vector<32x96xf32>, vector<8x96xf32> -> vector<8x96xf32>
    %37 = vector.broadcast %9 : vector<1x96xf32> to vector<8x96xf32>
    %38 = arith.addf %36, %37 : vector<8x96xf32>
    %39 = arith.addf %35, %38 : vector<8x96xf32>
    %40 = vector.extract_strided_slice %39 {offsets = [0, 0], sizes = [8, 64], strides = [1, 1]} : vector<8x96xf32> to vector<8x64xf32>
    %41 = arith.negf %40 : vector<8x64xf32>
    %42 = math.exp %41 : vector<8x64xf32>
    %cst_14 = arith.constant 1.000000e+00 : f32
    %43 = vector.broadcast %cst_14 : f32 to vector<8x64xf32>
    %44 = arith.addf %43, %42 : vector<8x64xf32>
    %45 = arith.divf %43, %44 : vector<8x64xf32>
    %46 = vector.extract_strided_slice %45 {offsets = [0, 0], sizes = [8, 32], strides = [1, 1]} : vector<8x64xf32> to vector<8x32xf32>
    %47 = vector.extract_strided_slice %45 {offsets = [0, 32], sizes = [8, 32], strides = [1, 1]} : vector<8x64xf32> to vector<8x32xf32>
    %48 = vector.extract_strided_slice %35 {offsets = [0, 64], sizes = [8, 32], strides = [1, 1]} : vector<8x96xf32> to vector<8x32xf32>
    %49 = vector.extract_strided_slice %38 {offsets = [0, 64], sizes = [8, 32], strides = [1, 1]} : vector<8x96xf32> to vector<8x32xf32>
    %50 = arith.mulf %46, %49 : vector<8x32xf32>
    %51 = arith.addf %48, %50 : vector<8x32xf32>
    %52 = math.tanh %51 : vector<8x32xf32>
    %53 = arith.subf %31, %52 : vector<8x32xf32>
    %54 = arith.mulf %47, %53 : vector<8x32xf32>
    %55 = arith.addf %52, %54 : vector<8x32xf32>
    %c1 = arith.constant 1 : index
    %c0_15 = arith.constant 0 : index
    %c0_16 = arith.constant 0 : index
    %56 = vector.load %arg5[%c1, %c0_15, %c0_16] : memref<8x8x32xf32, #tpu.memory_space<vmem>>, vector<1x8x32xf32>
    %57 = vector.shape_cast %56 : vector<1x8x32xf32> to vector<8x32xf32>
    %58 = vector.shape_cast %55 : vector<8x32xf32> to vector<1x8x32xf32>
    tpu.vector_store %arg5[%c1, %c0_15, %c0_16], %58 {strides = array<i32>} : memref<8x8x32xf32, #tpu.memory_space<vmem>>, vector<1x8x32xf32>,
    %59 = vector.extract_strided_slice %7 {offsets = [16, 0], sizes = [8, 96], strides = [1, 1]} : vector<64x96xf32> to vector<8x96xf32>
    %cst_17 = arith.constant dense<0.000000e+00> : vector<8x96xf32>
    %60 = tpu.matmul %55, %8, %cst_17 {dimension_numbers = #tpu.dot_dimension_numbers<[1], [0], [0], [1], [0, 0, 1, 1], [], []>} : vector<8x32xf32>, vector<32x96xf32>, vector<8x96xf32> -> vector<8x96xf32>
    %61 = vector.broadcast %9 : vector<1x96xf32> to vector<8x96xf32>
    %62 = arith.addf %60, %61 : vector<8x96xf32>
    %63 = arith.addf %59, %62 : vector<8x96xf32>
    %64 = vector.extract_strided_slice %63 {offsets = [0, 0], sizes = [8, 64], strides = [1, 1]} : vector<8x96xf32> to vector<8x64xf32>
    %65 = arith.negf %64 : vector<8x64xf32>
    %66 = math.exp %65 : vector<8x64xf32>
    %cst_18 = arith.constant 1.000000e+00 : f32
    %67 = vector.broadcast %cst_18 : f32 to vector<8x64xf32>
    %68 = arith.addf %67, %66 : vector<8x64xf32>
    %69 = arith.divf %67, %68 : vector<8x64xf32>
    %70 = vector.extract_strided_slice %69 {offsets = [0, 0], sizes = [8, 32], strides = [1, 1]} : vector<8x64xf32> to vector<8x32xf32>
    %71 = vector.extract_strided_slice %69 {offsets = [0, 32], sizes = [8, 32], strides = [1, 1]} : vector<8x64xf32> to vector<8x32xf32>
    %72 = vector.extract_strided_slice %59 {offsets = [0, 64], sizes = [8, 32], strides = [1, 1]} : vector<8x96xf32> to vector<8x32xf32>
    %73 = vector.extract_strided_slice %62 {offsets = [0, 64], sizes = [8, 32], strides = [1, 1]} : vector<8x96xf32> to vector<8x32xf32>
    %74 = arith.mulf %70, %73 : vector<8x32xf32>
    %75 = arith.addf %72, %74 : vector<8x32xf32>
    %76 = math.tanh %75 : vector<8x32xf32>
    %77 = arith.subf %55, %76 : vector<8x32xf32>
    %78 = arith.mulf %71, %77 : vector<8x32xf32>
    %79 = arith.addf %76, %78 : vector<8x32xf32>
    %c2 = arith.constant 2 : index
    %c0_19 = arith.constant 0 : index
    %c0_20 = arith.constant 0 : index
    %80 = vector.load %arg5[%c2, %c0_19, %c0_20] : memref<8x8x32xf32, #tpu.memory_space<vmem>>, vector<1x8x32xf32>
    %81 = vector.shape_cast %80 : vector<1x8x32xf32> to vector<8x32xf32>
    %82 = vector.shape_cast %79 : vector<8x32xf32> to vector<1x8x32xf32>
    tpu.vector_store %arg5[%c2, %c0_19, %c0_20], %82 {strides = array<i32>} : memref<8x8x32xf32, #tpu.memory_space<vmem>>, vector<1x8x32xf32>,
    %83 = vector.extract_strided_slice %7 {offsets = [24, 0], sizes = [8, 96], strides = [1, 1]} : vector<64x96xf32> to vector<8x96xf32>
    %cst_21 = arith.constant dense<0.000000e+00> : vector<8x96xf32>
    %84 = tpu.matmul %79, %8, %cst_21 {dimension_numbers = #tpu.dot_dimension_numbers<[1], [0], [0], [1], [0, 0, 1, 1], [], []>} : vector<8x32xf32>, vector<32x96xf32>, vector<8x96xf32> -> vector<8x96xf32>
    %85 = vector.broadcast %9 : vector<1x96xf32> to vector<8x96xf32>
    %86 = arith.addf %84, %85 : vector<8x96xf32>
    %87 = arith.addf %83, %86 : vector<8x96xf32>
    %88 = vector.extract_strided_slice %87 {offsets = [0, 0], sizes = [8, 64], strides = [1, 1]} : vector<8x96xf32> to vector<8x64xf32>
    %89 = arith.negf %88 : vector<8x64xf32>
    %90 = math.exp %89 : vector<8x64xf32>
    %cst_22 = arith.constant 1.000000e+00 : f32
    %91 = vector.broadcast %cst_22 : f32 to vector<8x64xf32>
    %92 = arith.addf %91, %90 : vector<8x64xf32>
    %93 = arith.divf %91, %92 : vector<8x64xf32>
    %94 = vector.extract_strided_slice %93 {offsets = [0, 0], sizes = [8, 32], strides = [1, 1]} : vector<8x64xf32> to vector<8x32xf32>
    %95 = vector.extract_strided_slice %93 {offsets = [0, 32], sizes = [8, 32], strides = [1, 1]} : vector<8x64xf32> to vector<8x32xf32>
    %96 = vector.extract_strided_slice %83 {offsets = [0, 64], sizes = [8, 32], strides = [1, 1]} : vector<8x96xf32> to vector<8x32xf32>
    %97 = vector.extract_strided_slice %86 {offsets = [0, 64], sizes = [8, 32], strides = [1, 1]} : vector<8x96xf32> to vector<8x32xf32>
    %98 = arith.mulf %94, %97 : vector<8x32xf32>
    %99 = arith.addf %96, %98 : vector<8x32xf32>
    %100 = math.tanh %99 : vector<8x32xf32>
    %101 = arith.subf %79, %100 : vector<8x32xf32>
    %102 = arith.mulf %95, %101 : vector<8x32xf32>
    %103 = arith.addf %100, %102 : vector<8x32xf32>
    %c3 = arith.constant 3 : index
    %c0_23 = arith.constant 0 : index
    %c0_24 = arith.constant 0 : index
    %104 = vector.load %arg5[%c3, %c0_23, %c0_24] : memref<8x8x32xf32, #tpu.memory_space<vmem>>, vector<1x8x32xf32>
    %105 = vector.shape_cast %104 : vector<1x8x32xf32> to vector<8x32xf32>
    %106 = vector.shape_cast %103 : vector<8x32xf32> to vector<1x8x32xf32>
    tpu.vector_store %arg5[%c3, %c0_23, %c0_24], %106 {strides = array<i32>} : memref<8x8x32xf32, #tpu.memory_space<vmem>>, vector<1x8x32xf32>,
    %107 = vector.extract_strided_slice %7 {offsets = [32, 0], sizes = [8, 96], strides = [1, 1]} : vector<64x96xf32> to vector<8x96xf32>
    %cst_25 = arith.constant dense<0.000000e+00> : vector<8x96xf32>
    %108 = tpu.matmul %103, %8, %cst_25 {dimension_numbers = #tpu.dot_dimension_numbers<[1], [0], [0], [1], [0, 0, 1, 1], [], []>} : vector<8x32xf32>, vector<32x96xf32>, vector<8x96xf32> -> vector<8x96xf32>
    %109 = vector.broadcast %9 : vector<1x96xf32> to vector<8x96xf32>
    %110 = arith.addf %108, %109 : vector<8x96xf32>
    %111 = arith.addf %107, %110 : vector<8x96xf32>
    %112 = vector.extract_strided_slice %111 {offsets = [0, 0], sizes = [8, 64], strides = [1, 1]} : vector<8x96xf32> to vector<8x64xf32>
    %113 = arith.negf %112 : vector<8x64xf32>
    %114 = math.exp %113 : vector<8x64xf32>
    %cst_26 = arith.constant 1.000000e+00 : f32
    %115 = vector.broadcast %cst_26 : f32 to vector<8x64xf32>
    %116 = arith.addf %115, %114 : vector<8x64xf32>
    %117 = arith.divf %115, %116 : vector<8x64xf32>
    %118 = vector.extract_strided_slice %117 {offsets = [0, 0], sizes = [8, 32], strides = [1, 1]} : vector<8x64xf32> to vector<8x32xf32>
    %119 = vector.extract_strided_slice %117 {offsets = [0, 32], sizes = [8, 32], strides = [1, 1]} : vector<8x64xf32> to vector<8x32xf32>
    %120 = vector.extract_strided_slice %107 {offsets = [0, 64], sizes = [8, 32], strides = [1, 1]} : vector<8x96xf32> to vector<8x32xf32>
    %121 = vector.extract_strided_slice %110 {offsets = [0, 64], sizes = [8, 32], strides = [1, 1]} : vector<8x96xf32> to vector<8x32xf32>
    %122 = arith.mulf %118, %121 : vector<8x32xf32>
    %123 = arith.addf %120, %122 : vector<8x32xf32>
    %124 = math.tanh %123 : vector<8x32xf32>
    %125 = arith.subf %103, %124 : vector<8x32xf32>
    %126 = arith.mulf %119, %125 : vector<8x32xf32>
    %127 = arith.addf %124, %126 : vector<8x32xf32>
    %c4 = arith.constant 4 : index
    %c0_27 = arith.constant 0 : index
    %c0_28 = arith.constant 0 : index
    %128 = vector.load %arg5[%c4, %c0_27, %c0_28] : memref<8x8x32xf32, #tpu.memory_space<vmem>>, vector<1x8x32xf32>
    %129 = vector.shape_cast %128 : vector<1x8x32xf32> to vector<8x32xf32>
    %130 = vector.shape_cast %127 : vector<8x32xf32> to vector<1x8x32xf32>
    tpu.vector_store %arg5[%c4, %c0_27, %c0_28], %130 {strides = array<i32>} : memref<8x8x32xf32, #tpu.memory_space<vmem>>, vector<1x8x32xf32>,
    %131 = vector.extract_strided_slice %7 {offsets = [40, 0], sizes = [8, 96], strides = [1, 1]} : vector<64x96xf32> to vector<8x96xf32>
    %cst_29 = arith.constant dense<0.000000e+00> : vector<8x96xf32>
    %132 = tpu.matmul %127, %8, %cst_29 {dimension_numbers = #tpu.dot_dimension_numbers<[1], [0], [0], [1], [0, 0, 1, 1], [], []>} : vector<8x32xf32>, vector<32x96xf32>, vector<8x96xf32> -> vector<8x96xf32>
    %133 = vector.broadcast %9 : vector<1x96xf32> to vector<8x96xf32>
    %134 = arith.addf %132, %133 : vector<8x96xf32>
    %135 = arith.addf %131, %134 : vector<8x96xf32>
    %136 = vector.extract_strided_slice %135 {offsets = [0, 0], sizes = [8, 64], strides = [1, 1]} : vector<8x96xf32> to vector<8x64xf32>
    %137 = arith.negf %136 : vector<8x64xf32>
    %138 = math.exp %137 : vector<8x64xf32>
    %cst_30 = arith.constant 1.000000e+00 : f32
    %139 = vector.broadcast %cst_30 : f32 to vector<8x64xf32>
    %140 = arith.addf %139, %138 : vector<8x64xf32>
    %141 = arith.divf %139, %140 : vector<8x64xf32>
    %142 = vector.extract_strided_slice %141 {offsets = [0, 0], sizes = [8, 32], strides = [1, 1]} : vector<8x64xf32> to vector<8x32xf32>
    %143 = vector.extract_strided_slice %141 {offsets = [0, 32], sizes = [8, 32], strides = [1, 1]} : vector<8x64xf32> to vector<8x32xf32>
    %144 = vector.extract_strided_slice %131 {offsets = [0, 64], sizes = [8, 32], strides = [1, 1]} : vector<8x96xf32> to vector<8x32xf32>
    %145 = vector.extract_strided_slice %134 {offsets = [0, 64], sizes = [8, 32], strides = [1, 1]} : vector<8x96xf32> to vector<8x32xf32>
    %146 = arith.mulf %142, %145 : vector<8x32xf32>
    %147 = arith.addf %144, %146 : vector<8x32xf32>
    %148 = math.tanh %147 : vector<8x32xf32>
    %149 = arith.subf %127, %148 : vector<8x32xf32>
    %150 = arith.mulf %143, %149 : vector<8x32xf32>
    %151 = arith.addf %148, %150 : vector<8x32xf32>
    %c5 = arith.constant 5 : index
    %c0_31 = arith.constant 0 : index
    %c0_32 = arith.constant 0 : index
    %152 = vector.load %arg5[%c5, %c0_31, %c0_32] : memref<8x8x32xf32, #tpu.memory_space<vmem>>, vector<1x8x32xf32>
    %153 = vector.shape_cast %152 : vector<1x8x32xf32> to vector<8x32xf32>
    %154 = vector.shape_cast %151 : vector<8x32xf32> to vector<1x8x32xf32>
    tpu.vector_store %arg5[%c5, %c0_31, %c0_32], %154 {strides = array<i32>} : memref<8x8x32xf32, #tpu.memory_space<vmem>>, vector<1x8x32xf32>,
    %155 = vector.extract_strided_slice %7 {offsets = [48, 0], sizes = [8, 96], strides = [1, 1]} : vector<64x96xf32> to vector<8x96xf32>
    %cst_33 = arith.constant dense<0.000000e+00> : vector<8x96xf32>
    %156 = tpu.matmul %151, %8, %cst_33 {dimension_numbers = #tpu.dot_dimension_numbers<[1], [0], [0], [1], [0, 0, 1, 1], [], []>} : vector<8x32xf32>, vector<32x96xf32>, vector<8x96xf32> -> vector<8x96xf32>
    %157 = vector.broadcast %9 : vector<1x96xf32> to vector<8x96xf32>
    %158 = arith.addf %156, %157 : vector<8x96xf32>
    %159 = arith.addf %155, %158 : vector<8x96xf32>
    %160 = vector.extract_strided_slice %159 {offsets = [0, 0], sizes = [8, 64], strides = [1, 1]} : vector<8x96xf32> to vector<8x64xf32>
    %161 = arith.negf %160 : vector<8x64xf32>
    %162 = math.exp %161 : vector<8x64xf32>
    %cst_34 = arith.constant 1.000000e+00 : f32
    %163 = vector.broadcast %cst_34 : f32 to vector<8x64xf32>
    %164 = arith.addf %163, %162 : vector<8x64xf32>
    %165 = arith.divf %163, %164 : vector<8x64xf32>
    %166 = vector.extract_strided_slice %165 {offsets = [0, 0], sizes = [8, 32], strides = [1, 1]} : vector<8x64xf32> to vector<8x32xf32>
    %167 = vector.extract_strided_slice %165 {offsets = [0, 32], sizes = [8, 32], strides = [1, 1]} : vector<8x64xf32> to vector<8x32xf32>
    %168 = vector.extract_strided_slice %155 {offsets = [0, 64], sizes = [8, 32], strides = [1, 1]} : vector<8x96xf32> to vector<8x32xf32>
    %169 = vector.extract_strided_slice %158 {offsets = [0, 64], sizes = [8, 32], strides = [1, 1]} : vector<8x96xf32> to vector<8x32xf32>
    %170 = arith.mulf %166, %169 : vector<8x32xf32>
    %171 = arith.addf %168, %170 : vector<8x32xf32>
    %172 = math.tanh %171 : vector<8x32xf32>
    %173 = arith.subf %151, %172 : vector<8x32xf32>
    %174 = arith.mulf %167, %173 : vector<8x32xf32>
    %175 = arith.addf %172, %174 : vector<8x32xf32>
    %c6 = arith.constant 6 : index
    %c0_35 = arith.constant 0 : index
    %c0_36 = arith.constant 0 : index
    %176 = vector.load %arg5[%c6, %c0_35, %c0_36] : memref<8x8x32xf32, #tpu.memory_space<vmem>>, vector<1x8x32xf32>
    %177 = vector.shape_cast %176 : vector<1x8x32xf32> to vector<8x32xf32>
    %178 = vector.shape_cast %175 : vector<8x32xf32> to vector<1x8x32xf32>
    tpu.vector_store %arg5[%c6, %c0_35, %c0_36], %178 {strides = array<i32>} : memref<8x8x32xf32, #tpu.memory_space<vmem>>, vector<1x8x32xf32>,
    %179 = vector.extract_strided_slice %7 {offsets = [56, 0], sizes = [8, 96], strides = [1, 1]} : vector<64x96xf32> to vector<8x96xf32>
    %cst_37 = arith.constant dense<0.000000e+00> : vector<8x96xf32>
    %180 = tpu.matmul %175, %8, %cst_37 {dimension_numbers = #tpu.dot_dimension_numbers<[1], [0], [0], [1], [0, 0, 1, 1], [], []>} : vector<8x32xf32>, vector<32x96xf32>, vector<8x96xf32> -> vector<8x96xf32>
    %181 = vector.broadcast %9 : vector<1x96xf32> to vector<8x96xf32>
    %182 = arith.addf %180, %181 : vector<8x96xf32>
    %183 = arith.addf %179, %182 : vector<8x96xf32>
    %184 = vector.extract_strided_slice %183 {offsets = [0, 0], sizes = [8, 64], strides = [1, 1]} : vector<8x96xf32> to vector<8x64xf32>
    %185 = arith.negf %184 : vector<8x64xf32>
    %186 = math.exp %185 : vector<8x64xf32>
    %cst_38 = arith.constant 1.000000e+00 : f32
    %187 = vector.broadcast %cst_38 : f32 to vector<8x64xf32>
    %188 = arith.addf %187, %186 : vector<8x64xf32>
    %189 = arith.divf %187, %188 : vector<8x64xf32>
    %190 = vector.extract_strided_slice %189 {offsets = [0, 0], sizes = [8, 32], strides = [1, 1]} : vector<8x64xf32> to vector<8x32xf32>
    %191 = vector.extract_strided_slice %189 {offsets = [0, 32], sizes = [8, 32], strides = [1, 1]} : vector<8x64xf32> to vector<8x32xf32>
    %192 = vector.extract_strided_slice %179 {offsets = [0, 64], sizes = [8, 32], strides = [1, 1]} : vector<8x96xf32> to vector<8x32xf32>
    %193 = vector.extract_strided_slice %182 {offsets = [0, 64], sizes = [8, 32], strides = [1, 1]} : vector<8x96xf32> to vector<8x32xf32>
    %194 = arith.mulf %190, %193 : vector<8x32xf32>
    %195 = arith.addf %192, %194 : vector<8x32xf32>
    %196 = math.tanh %195 : vector<8x32xf32>
    %197 = arith.subf %175, %196 : vector<8x32xf32>
    %198 = arith.mulf %191, %197 : vector<8x32xf32>
    %199 = arith.addf %196, %198 : vector<8x32xf32>
    %c7 = arith.constant 7 : index
    %c0_39 = arith.constant 0 : index
    %c0_40 = arith.constant 0 : index
    %200 = vector.load %arg5[%c7, %c0_39, %c0_40] : memref<8x8x32xf32, #tpu.memory_space<vmem>>, vector<1x8x32xf32>
    %201 = vector.shape_cast %200 : vector<1x8x32xf32> to vector<8x32xf32>
    %202 = vector.shape_cast %199 : vector<8x32xf32> to vector<1x8x32xf32>
    tpu.vector_store %arg5[%c7, %c0_39, %c0_40], %202 {strides = array<i32>} : memref<8x8x32xf32, #tpu.memory_space<vmem>>, vector<1x8x32xf32>,
    return
  }
  func.func @transform_0(%arg0: i32) -> (i32, i32) {
    %c0_i32 = arith.constant 0 : i32
    %c0_i32_0 = arith.constant 0 : i32
    %c0_i32_1 = arith.constant 0 : i32
    return %c0_i32, %c0_i32_0 : i32, i32
  }
  func.func @transform_1(%arg0: i32) -> (i32, i32) {
    %c0_i32 = arith.constant 0 : i32
    %c0_i32_0 = arith.constant 0 : i32
    %c0_i32_1 = arith.constant 0 : i32
    return %c0_i32, %c0_i32_0 : i32, i32
  }
  func.func @transform_2(%arg0: i32) -> (i32, i32) {
    %c0_i32 = arith.constant 0 : i32
    %c0_i32_0 = arith.constant 0 : i32
    %c0_i32_1 = arith.constant 0 : i32
    return %c0_i32, %c0_i32_0 : i32, i32
  }
  func.func @transform_3(%arg0: i32) -> (i32, i32) {
    %c0_i32 = arith.constant 0 : i32
    %c0_i32_0 = arith.constant 0 : i32
    %c0_i32_1 = arith.constant 0 : i32
    return %c0_i32, %c0_i32_0 : i32, i32
  }
  func.func @transform_4(%arg0: i32) -> (i32, i32, i32) {
    %c0_i32 = arith.constant 0 : i32
    %c0_i32_0 = arith.constant 0 : i32
    %c0_i32_1 = arith.constant 0 : i32
    %c0_i32_2 = arith.constant 0 : i32
    return %c0_i32, %c0_i32_0, %c0_i32_1 : i32, i32, i32
  }
}

</mosaic_0001>

<llo_original>
// kernel: tpu_custom_call.1
$region0: #{tpu_custom_call.1}
  #allocation0 [shape = 'u32[]', space=smem, size = 0x4, offset = 0x4, fixed_abs, tag = 'smem constant byte address 0x4 - core index']
  #allocation1 [shape = 'u32[72,128]{1,0:T(1,128)}', space=vmem, size = 0x9000, scoped, tag = 'internal scratch']
  %s0 = inlined_call_operand.vmem [shape: s32[64,1], index: 0, kind: input, shape index: {}]
  %s1 = inlined_call_operand.vmem [shape: f32[56,96], index: 1, kind: input, shape index: {}]
  %s2 = inlined_call_operand.hbm [shape: f32[32,96], index: 2, kind: input, shape index: {}]
  %s3 = inlined_call_operand.vmem [shape: f32[1,96], index: 3, kind: input, shape index: {}]
  %s4 = inlined_call_operand.hbm [shape: f32[8,8,32], index: 4, kind: output, shape index: {}]
  %s5 = sld [smem:[#allocation0]]
  $region30: #{tpu_custom_call.1} parent=0
    _
  %s7 = ssub.s32 1, %s5
  %s8 = scalar_select 0, %s7, %s5
  $region1: #{tpu_custom_call.1} parent=0
    #allocation2 [shape = 'u8[16384]{0}', space=vmem, size = 0x4000, scoped, tag = 'input window, operand 2, single buffered']
    #allocation3 [shape = 's32[1]{0}', space=sflag, size = 0x4, scoped, tag = 'scoped memory for tpu_custom_call.1']
    #allocation4 [shape = 's32[1]{0}', space=sflag, size = 0x4, scoped, tag = 'scoped memory for tpu_custom_call.1']
    #allocation5 [shape = 'u8[32768]{0}', space=vmem, size = 0x8000, scoped, tag = 'output window, operand 0, single buffered']
    %9 = vsyncpa [#allocation3], 0
    %10 = vsyncpa [#allocation4], 0
    // Predicated region
    $region2: #{tpu_custom_call.1} parent=1 // pred_check
      _
    $region3: #{tpu_custom_call.1} parent=1 // pred_check_branch
      %12 = sbr.rel (0) target = $region5
    $region4: #{tpu_custom_call.1} parent=1 // pred_region
      _
    $region5: #{tpu_custom_call.1} parent=1 // pred_fallthru
      _
    // Predicated region
    $region6: #{tpu_custom_call.1} parent=1 // pred_check
      _
    $region7: #{tpu_custom_call.1} parent=1 // pred_check_branch
      %14 = sbr.rel (0) target = $region9
    $region8: #{tpu_custom_call.1} parent=1 // pred_region
      _
    $region9: #{tpu_custom_call.1} parent=1 // pred_fallthru
      _
    // Predicated region
    $region10: #{tpu_custom_call.1} parent=1 // pred_check
      _
    $region11: #{tpu_custom_call.1} parent=1 // pred_check_branch
      %16 = sbr.rel (0) target = $region13
    $region12: #{tpu_custom_call.1} parent=1 // pred_region
      %18 = vsyncadd [#allocation3], 0
      %s19 = sshll.u32 %s2, 4
      %s20 = int_to_ptr.hbm [resolvable:$true] %s19
      %s21 = sshll.u32 [#allocation2], 4
      %s22 = int_to_ptr.vmem [resolvable:$true] %s21
      %27 = dma.hbm_to_vmem [thread:$0]  %s20, 512, %s22, [#allocation3], 128, 128, 8
    $region13: #{tpu_custom_call.1} parent=1 // pred_fallthru
      _
    // Predicated region
    $region14: #{tpu_custom_call.1} parent=1 // pred_check
      _
    $region15: #{tpu_custom_call.1} parent=1 // pred_check_branch
      %29 = sbr.rel (0) target = $region17
    $region16: #{tpu_custom_call.1} parent=1 // pred_region
      _
    $region17: #{tpu_custom_call.1} parent=1 // pred_fallthru
      _
    // Predicated region
    $region18: #{tpu_custom_call.1} parent=1 // pred_check
      _
    $region19: #{tpu_custom_call.1} parent=1 // pred_check_branch
      %31 = sbr.rel (0) target = $region21
    $region20: #{tpu_custom_call.1} parent=1 // pred_region
      %33 = dma.done [#allocation3], 512
    $region21: #{tpu_custom_call.1} parent=1 // pred_fallthru
      _
    %v34 = vld [vmem:[%s0] sm:$0xff]
    %v35 = vld [vmem:[%s0 + $0x8] sm:$0xff]
    %v36 = vld [vmem:[%s0 + $0x10] sm:$0xff]
    %v37 = vld [vmem:[%s0 + $0x18] sm:$0xff]
    %v38 = vld [vmem:[%s0 + $0x20] sm:$0xff]
    %v39 = vld [vmem:[%s0 + $0x28] sm:$0xff]
    %v40 = vld [vmem:[%s0 + $0x30] sm:$0xff]
    %v41 = vld [vmem:[%s0 + $0x38] sm:$0xff]
    %v42 = vlaneseq
    %v43 = vand.u32 %v42, 127
    %44 = vset.pattern.permute.xlu0 0
    %45 = vperm.xlu0 %44, %v34
    %v46 = vpop.permute.xlu0 %45
    %47 = vset.pattern.permute.xlu0 0
    %48 = vperm.xlu0 %47, %v35
    %v49 = vpop.permute.xlu0 %48
    %50 = vset.pattern.permute.xlu0 0
    %51 = vperm.xlu0 %50, %v36
    %v52 = vpop.permute.xlu0 %51
    %53 = vset.pattern.permute.xlu0 0
    %54 = vperm.xlu0 %53, %v37
    %v55 = vpop.permute.xlu0 %54
    %56 = vset.pattern.permute.xlu0 0
    %57 = vperm.xlu0 %56, %v38
    %v58 = vpop.permute.xlu0 %57
    %59 = vset.pattern.permute.xlu0 0
    %60 = vperm.xlu0 %59, %v39
    %v61 = vpop.permute.xlu0 %60
    %62 = vset.pattern.permute.xlu0 0
    %63 = vperm.xlu0 %62, %v40
    %v64 = vpop.permute.xlu0 %63
    %65 = vset.pattern.permute.xlu0 0
    %66 = vperm.xlu0 %65, %v41
    %v67 = vpop.permute.xlu0 %66
    %vm68 = vcmp.eq.s32.totalorder %v46, %v43
    %vm69 = vcmp.eq.s32.totalorder %v49, %v43
    %vm70 = vcmp.eq.s32.totalorder %v52, %v43
    %vm71 = vcmp.eq.s32.totalorder %v55, %v43
    %vm72 = vcmp.eq.s32.totalorder %v58, %v43
    %vm73 = vcmp.eq.s32.totalorder %v61, %v43
    %vm74 = vcmp.eq.s32.totalorder %v64, %v43
    %vm75 = vcmp.eq.s32.totalorder %v67, %v43
    %v76 = vsel %vm68, 1, 0
    %v77 = vsel %vm69, 1, 0
    %v78 = vsel %vm70, 1, 0
    %v79 = vsel %vm71, 1, 0
    %v80 = vsel %vm72, 1, 0
    %v81 = vsel %vm73, 1, 0
    %v82 = vsel %vm74, 1, 0
    %v83 = vsel %vm75, 1, 0
    %v84 = vcvt.s32.f32 %v76
    %v85 = vcvt.s32.f32 %v77
    %v86 = vcvt.s32.f32 %v78
    %v87 = vcvt.s32.f32 %v79
    %v88 = vcvt.s32.f32 %v80
    %v89 = vcvt.s32.f32 %v81
    %v90 = vcvt.s32.f32 %v82
    %v91 = vcvt.s32.f32 %v83
    %v92 = vld [vmem:[%s1] sm:$0xff]
    %v93 = vld [vmem:[%s1 + $0x8] sm:$0xff]
    %v94 = vld [vmem:[%s1 + $0x10] sm:$0xff]
    %v95 = vld [vmem:[%s1 + $0x18] sm:$0xff]
    %v96 = vld [vmem:[%s1 + $0x20] sm:$0xff]
    %v97 = vld [vmem:[%s1 + $0x28] sm:$0xff]
    %v98 = vld [vmem:[%s1 + $0x30] sm:$0xff]
    %vm99 = vcmask 457728
    %v101 = vsel %vm99, %v84, 0
    %v104 = vsel %vm99, %v85, 0
    %v107 = vsel %vm99, %v86, 0
    %v110 = vsel %vm99, %v87, 0
    %v113 = vsel %vm99, %v88, 0
    %v116 = vsel %vm99, %v89, 0
    %v119 = vsel %vm99, %v90, 0
    %v122 = vsel %vm99, %v91, 0
    %124 = vmatpush.msra.mxu0 0.0
    %125 = vmatpush.msra.mxu0 0.0
    %126 = vmatpush.msra.mxu0 0.0
    %127 = vmatpush.msra.mxu0 0.0
    %128 = vmatpush.msra.mxu0 0.0
    %129 = vmatpush.msra.mxu0 0.0
    %130 = vmatpush.msra.mxu0 0.0
    %131 = vmatpush.msra.mxu0 0.0
    %132 = vmatpush.msra.mxu0 0.0
    %133 = vmatpush.msra.mxu0 %v98
    %134 = vmatpush.msra.mxu0 %v97
    %135 = vmatpush.msra.mxu0 %v96
    %136 = vmatpush.msra.mxu0 %v95
    %137 = vmatpush.msra.mxu0 %v94
    %138 = vmatpush.msra.mxu0 %v93
    %139 = vmatpush.msra.mxu0 %v92
    %140 = vmatmul.f32.gmra.mxu0 %v101
    %v141 = vpop.f32.mrf.mxu0
    %v142 = vadd.f32 0.0, %v141
    %143 = vmatmul.f32.gmra.mxu0 %v104
    %v144 = vpop.f32.mrf.mxu0
    %v145 = vadd.f32 0.0, %v144
    %146 = vmatmul.f32.gmra.mxu0 %v107
    %v147 = vpop.f32.mrf.mxu0
    %v148 = vadd.f32 0.0, %v147
    %149 = vmatmul.f32.gmra.mxu0 %v110
    %v150 = vpop.f32.mrf.mxu0
    %v151 = vadd.f32 0.0, %v150
    %152 = vmatmul.f32.gmra.mxu0 %v113
    %v153 = vpop.f32.mrf.mxu0
    %v154 = vadd.f32 0.0, %v153
    %155 = vmatmul.f32.gmra.mxu0 %v116
    %v156 = vpop.f32.mrf.mxu0
    %v157 = vadd.f32 0.0, %v156
    %158 = vmatmul.f32.gmra.mxu0 %v119
    %v159 = vpop.f32.mrf.mxu0
    %v160 = vadd.f32 0.0, %v159
    %161 = vmatmul.f32.gmra.mxu0 %v122
    %v162 = vpop.f32.mrf.mxu0
    %v163 = vadd.f32 0.0, %v162
    %164 = vdwg.mxu0
    %v165 = vld [vmem:[#allocation2] sm:$0xff]
    %v166 = vld [vmem:[#allocation2 + $0x8] sm:$0xff]
    %v167 = vld [vmem:[#allocation2 + $0x10] sm:$0xff]
    %v168 = vld [vmem:[#allocation2 + $0x18] sm:$0xff]
    %v169 = vld [vmem:[%s3] sm:$0x1]
    %v171 = vperm.slane %v169, 0
    %vm173 = vcmask 261120
    %v175 = vsel %vm173, 0.0, 0
    %177 = vmatpush.msra.mxu0 0.0
    %178 = vmatpush.msra.mxu0 0.0
    %179 = vmatpush.msra.mxu0 0.0
    %180 = vmatpush.msra.mxu0 0.0
    %181 = vmatpush.msra.mxu0 0.0
    %182 = vmatpush.msra.mxu0 0.0
    %183 = vmatpush.msra.mxu0 0.0
    %184 = vmatpush.msra.mxu0 0.0
    %185 = vmatpush.msra.mxu0 0.0
    %186 = vmatpush.msra.mxu0 0.0
    %187 = vmatpush.msra.mxu0 0.0
    %188 = vmatpush.msra.mxu0 0.0
    %189 = vmatpush.msra.mxu0 %v168
    %190 = vmatpush.msra.mxu0 %v167
    %191 = vmatpush.msra.mxu0 %v166
    %192 = vmatpush.msra.mxu0 %v165
    %193 = vmatmul.f32.gmra.mxu0 %v175
    %v194 = vpop.f32.mrf.mxu0
    %v195 = vadd.f32 %v171, %v194
    %196 = vdwg.mxu0
    %v197 = vadd.f32 %v142, %v195
    %v198 = vxor.u32 %v197, 2147483648
    %v199 = vmul.f32 %v198, 1.442695
    %v200 = vpow.pop %v199
    %v201 = vadd.f32 %v200, 1.0
    %v202 = vrcp.pop %v201
    %v203 = vmul.f32 %v201, %v202
    %v204 = vsub.f32 1.0, %v203
    %v205 = vmul.f32 %v202, %v204
    %v206 = vadd.f32 %v202, %v205
    %vm207 = vweird.f32 %v201
    %vm208 = vweird.f32 %v202
    %vm209 = vmor %vm207, %vm208
    %v210 = vsel %vm209, %v202, %v206
    %v211 = vand.u32 2147483647, %v201
    %vm212 = vcmp.eq.f32.partialorder %v211, 8.507059e+37
    %v213 = vand.u32 %v201, 2147483648
    %v214 = vor.u32 1.1754944e-38, %v213
    %v215 = vsel %vm212, %v214, %v210
    %v216 = vmul.f32 1.0, %v215
    %218 = vrot.lane.b32.xlu0 %v195, 64
    %v219 = vpop.permute.xlu0 %218
    %v221 = vmul.f32 %v216, %v219
    %223 = vrot.lane.b32.xlu0 %v221, 64
    %v224 = vpop.permute.xlu0 %223
    %v226 = vadd.f32 %v142, %v224
    %v227 = vtanh.pop %v226
    %v228 = vsub.f32 0.0, %v227
    %230 = vrot.lane.b32.xlu0 %v228, 96
    %v231 = vpop.permute.xlu0 %230
    %v233 = vmul.f32 %v216, %v231
    %235 = vrot.lane.b32.xlu0 %v233, 32
    %v236 = vpop.permute.xlu0 %235
    %v238 = vadd.f32 %v227, %v236
    %240 = vrot.lane.b32.xlu0 %v238, 64
    %v241 = vpop.permute.xlu0 %240
    %243 = vst.msk [vmem:[#allocation5] sm:$0xff] %vm173, %v241
    %v244 = vsel %vm173, %v241, 0
    %246 = vmatpush.msra.mxu0 0.0
    %247 = vmatpush.msra.mxu0 0.0
    %248 = vmatpush.msra.mxu0 0.0
    %249 = vmatpush.msra.mxu0 0.0
    %250 = vmatpush.msra.mxu0 0.0
    %251 = vmatpush.msra.mxu0 0.0
    %252 = vmatpush.msra.mxu0 0.0
    %253 = vmatpush.msra.mxu0 0.0
    %254 = vmatpush.msra.mxu0 0.0
    %255 = vmatpush.msra.mxu0 0.0
    %256 = vmatpush.msra.mxu0 0.0
    %257 = vmatpush.msra.mxu0 0.0
    %258 = vmatpush.msra.mxu0 %v168
    %259 = vmatpush.msra.mxu0 %v167
    %260 = vmatpush.msra.mxu0 %v166
    %261 = vmatpush.msra.mxu0 %v165
    %262 = vmatmul.f32.gmra.mxu0 %v244
    %v263 = vpop.f32.mrf.mxu0
    %v264 = vadd.f32 %v171, %v263
    %265 = vdwg.mxu0
    %v266 = vadd.f32 %v145, %v264
    %v267 = vxor.u32 %v266, 2147483648
    %v268 = vmul.f32 %v267, 1.442695
    %v269 = vpow.pop %v268
    %v270 = vadd.f32 %v269, 1.0
    %v271 = vrcp.pop %v270
    %v272 = vmul.f32 %v270, %v271
    %v273 = vsub.f32 1.0, %v272
    %v274 = vmul.f32 %v271, %v273
    %v275 = vadd.f32 %v271, %v274
    %vm276 = vweird.f32 %v270
    %vm277 = vweird.f32 %v271
    %vm278 = vmor %vm276, %vm277
    %v279 = vsel %vm278, %v271, %v275
    %v280 = vand.u32 2147483647, %v270
    %vm281 = vcmp.eq.f32.partialorder %v280, 8.507059e+37
    %v282 = vand.u32 %v270, 2147483648
    %v283 = vor.u32 1.1754944e-38, %v282
    %v284 = vsel %vm281, %v283, %v279
    %v285 = vmul.f32 1.0, %v284
    %287 = vrot.lane.b32.xlu0 %v264, 64
    %v288 = vpop.permute.xlu0 %287
    %v290 = vmul.f32 %v285, %v288
    %292 = vrot.lane.b32.xlu0 %v290, 64
    %v293 = vpop.permute.xlu0 %292
    %v295 = vadd.f32 %v145, %v293
    %v296 = vtanh.pop %v295
    %v297 = vsub.f32 %v238, %v296
    %299 = vrot.lane.b32.xlu0 %v297, 96
    %v300 = vpop.permute.xlu0 %299
    %v302 = vmul.f32 %v285, %v300
    %304 = vrot.lane.b32.xlu0 %v302, 32
    %v305 = vpop.permute.xlu0 %304
    %v307 = vadd.f32 %v296, %v305
    %309 = vrot.lane.b32.xlu0 %v307, 64
    %v310 = vpop.permute.xlu0 %309
    %s312 = scalar_lea.vmem [#allocation5], 8
    %313 = vst.msk [vmem:[%s312] sm:$0xff] %vm173, %v310
    %v314 = vsel %vm173, %v310, 0
    %316 = vmatpush.msra.mxu0 0.0
    %317 = vmatpush.msra.mxu0 0.0
    %318 = vmatpush.msra.mxu0 0.0
    %319 = vmatpush.msra.mxu0 0.0
    %320 = vmatpush.msra.mxu0 0.0
    %321 = vmatpush.msra.mxu0 0.0
    %322 = vmatpush.msra.mxu0 0.0
    %323 = vmatpush.msra.mxu0 0.0
    %324 = vmatpush.msra.mxu0 0.0
    %325 = vmatpush.msra.mxu0 0.0
    %326 = vmatpush.msra.mxu0 0.0
    %327 = vmatpush.msra.mxu0 0.0
    %328 = vmatpush.msra.mxu0 %v168
    %329 = vmatpush.msra.mxu0 %v167
    %330 = vmatpush.msra.mxu0 %v166
    %331 = vmatpush.msra.mxu0 %v165
    %332 = vmatmul.f32.gmra.mxu0 %v314
    %v333 = vpop.f32.mrf.mxu0
    %v334 = vadd.f32 %v171, %v333
    %335 = vdwg.mxu0
    %v336 = vadd.f32 %v148, %v334
    %v337 = vxor.u32 %v336, 2147483648
    %v338 = vmul.f32 %v337, 1.442695
    %v339 = vpow.pop %v338
    %v340 = vadd.f32 %v339, 1.0
    %v341 = vrcp.pop %v340
    %v342 = vmul.f32 %v340, %v341
    %v343 = vsub.f32 1.0, %v342
    %v344 = vmul.f32 %v341, %v343
    %v345 = vadd.f32 %v341, %v344
    %vm346 = vweird.f32 %v340
    %vm347 = vweird.f32 %v341
    %vm348 = vmor %vm346, %vm347
    %v349 = vsel %vm348, %v341, %v345
    %v350 = vand.u32 2147483647, %v340
    %vm351 = vcmp.eq.f32.partialorder %v350, 8.507059e+37
    %v352 = vand.u32 %v340, 2147483648
    %v353 = vor.u32 1.1754944e-38, %v352
    %v354 = vsel %vm351, %v353, %v349
    %v355 = vmul.f32 1.0, %v354
    %357 = vrot.lane.b32.xlu0 %v334, 64
    %v358 = vpop.permute.xlu0 %357
    %v360 = vmul.f32 %v355, %v358
    %362 = vrot.lane.b32.xlu0 %v360, 64
    %v363 = vpop.permute.xlu0 %362
    %v365 = vadd.f32 %v148, %v363
    %v366 = vtanh.pop %v365
    %v367 = vsub.f32 %v307, %v366
    %369 = vrot.lane.b32.xlu0 %v367, 96
    %v370 = vpop.permute.xlu0 %369
    %v372 = vmul.f32 %v355, %v370
    %374 = vrot.lane.b32.xlu0 %v372, 32
    %v375 = vpop.permute.xlu0 %374
    %v377 = vadd.f32 %v366, %v375
    %379 = vrot.lane.b32.xlu0 %v377, 64
    %v380 = vpop.permute.xlu0 %379
    %s382 = scalar_lea.vmem [#allocation5], 16
    %383 = vst.msk [vmem:[%s382] sm:$0xff] %vm173, %v380
    %v384 = vsel %vm173, %v380, 0
    %386 = vmatpush.msra.mxu0 0.0
    %387 = vmatpush.msra.mxu0 0.0
    %388 = vmatpush.msra.mxu0 0.0
    %389 = vmatpush.msra.mxu0 0.0
    %390 = vmatpush.msra.mxu0 0.0
    %391 = vmatpush.msra.mxu0 0.0
    %392 = vmatpush.msra.mxu0 0.0
    %393 = vmatpush.msra.mxu0 0.0
    %394 = vmatpush.msra.mxu0 0.0
    %395 = vmatpush.msra.mxu0 0.0
    %396 = vmatpush.msra.mxu0 0.0
    %397 = vmatpush.msra.mxu0 0.0
    %398 = vmatpush.msra.mxu0 %v168
    %399 = vmatpush.msra.mxu0 %v167
    %400 = vmatpush.msra.mxu0 %v166
    %401 = vmatpush.msra.mxu0 %v165
    %402 = vmatmul.f32.gmra.mxu0 %v384
    %v403 = vpop.f32.mrf.mxu0
    %v404 = vadd.f32 %v171, %v403
    %405 = vdwg.mxu0
    %v406 = vadd.f32 %v151, %v404
    %v407 = vxor.u32 %v406, 2147483648
    %v408 = vmul.f32 %v407, 1.442695
    %v409 = vpow.pop %v408
    %v410 = vadd.f32 %v409, 1.0
    %v411 = vrcp.pop %v410
    %v412 = vmul.f32 %v410, %v411
    %v413 = vsub.f32 1.0, %v412
    %v414 = vmul.f32 %v411, %v413
    %v415 = vadd.f32 %v411, %v414
    %vm416 = vweird.f32 %v410
    %vm417 = vweird.f32 %v411
    %vm418 = vmor %vm416, %vm417
    %v419 = vsel %vm418, %v411, %v415
    %v420 = vand.u32 2147483647, %v410
    %vm421 = vcmp.eq.f32.partialorder %v420, 8.507059e+37
    %v422 = vand.u32 %v410, 2147483648
    %v423 = vor.u32 1.1754944e-38, %v422
    %v424 = vsel %vm421, %v423, %v419
    %v425 = vmul.f32 1.0, %v424
    %427 = vrot.lane.b32.xlu0 %v404, 64
    %v428 = vpop.permute.xlu0 %427
    %v430 = vmul.f32 %v425, %v428
    %432 = vrot.lane.b32.xlu0 %v430, 64
    %v433 = vpop.permute.xlu0 %432
    %v435 = vadd.f32 %v151, %v433
    %v436 = vtanh.pop %v435
    %v437 = vsub.f32 %v377, %v436
    %439 = vrot.lane.b32.xlu0 %v437, 96
    %v440 = vpop.permute.xlu0 %439
    %v442 = vmul.f32 %v425, %v440
    %444 = vrot.lane.b32.xlu0 %v442, 32
    %v445 = vpop.permute.xlu0 %444
    %v447 = vadd.f32 %v436, %v445
    %449 = vrot.lane.b32.xlu0 %v447, 64
    %v450 = vpop.permute.xlu0 %449
    %s452 = scalar_lea.vmem [#allocation5], 24
    %453 = vst.msk [vmem:[%s452] sm:$0xff] %vm173, %v450
    %v454 = vsel %vm173, %v450, 0
    %456 = vmatpush.msra.mxu0 0.0
    %457 = vmatpush.msra.mxu0 0.0
    %458 = vmatpush.msra.mxu0 0.0
    %459 = vmatpush.msra.mxu0 0.0
    %460 = vmatpush.msra.mxu0 0.0
    %461 = vmatpush.msra.mxu0 0.0
    %462 = vmatpush.msra.mxu0 0.0
    %463 = vmatpush.msra.mxu0 0.0
    %464 = vmatpush.msra.mxu0 0.0
    %465 = vmatpush.msra.mxu0 0.0
    %466 = vmatpush.msra.mxu0 0.0
    %467 = vmatpush.msra.mxu0 0.0
    %468 = vmatpush.msra.mxu0 %v168
    %469 = vmatpush.msra.mxu0 %v167
    %470 = vmatpush.msra.mxu0 %v166
    %471 = vmatpush.msra.mxu0 %v165
    %472 = vmatmul.f32.gmra.mxu0 %v454
    %v473 = vpop.f32.mrf.mxu0
    %v474 = vadd.f32 %v171, %v473
    %475 = vdwg.mxu0
    %v476 = vadd.f32 %v154, %v474
    %v477 = vxor.u32 %v476, 2147483648
    %v478 = vmul.f32 %v477, 1.442695
    %v479 = vpow.pop %v478
    %v480 = vadd.f32 %v479, 1.0
    %v481 = vrcp.pop %v480
    %v482 = vmul.f32 %v480, %v481
    %v483 = vsub.f32 1.0, %v482
    %v484 = vmul.f32 %v481, %v483
    %v485 = vadd.f32 %v481, %v484
    %vm486 = vweird.f32 %v480
    %vm487 = vweird.f32 %v481
    %vm488 = vmor %vm486, %vm487
    %v489 = vsel %vm488, %v481, %v485
    %v490 = vand.u32 2147483647, %v480
    %vm491 = vcmp.eq.f32.partialorder %v490, 8.507059e+37
    %v492 = vand.u32 %v480, 2147483648
    %v493 = vor.u32 1.1754944e-38, %v492
    %v494 = vsel %vm491, %v493, %v489
    %v495 = vmul.f32 1.0, %v494
    %497 = vrot.lane.b32.xlu0 %v474, 64
    %v498 = vpop.permute.xlu0 %497
    %v500 = vmul.f32 %v495, %v498
    %502 = vrot.lane.b32.xlu0 %v500, 64
    %v503 = vpop.permute.xlu0 %502
    %v505 = vadd.f32 %v154, %v503
    %v506 = vtanh.pop %v505
    %v507 = vsub.f32 %v447, %v506
    %509 = vrot.lane.b32.xlu0 %v507, 96
    %v510 = vpop.permute.xlu0 %509
    %v512 = vmul.f32 %v495, %v510
    %514 = vrot.lane.b32.xlu0 %v512, 32
    %v515 = vpop.permute.xlu0 %514
    %v517 = vadd.f32 %v506, %v515
    %519 = vrot.lane.b32.xlu0 %v517, 64
    %v520 = vpop.permute.xlu0 %519
    %s522 = scalar_lea.vmem [#allocation5], 32
    %523 = vst.msk [vmem:[%s522] sm:$0xff] %vm173, %v520
    %v524 = vsel %vm173, %v520, 0
    %526 = vmatpush.msra.mxu0 0.0
    %527 = vmatpush.msra.mxu0 0.0
    %528 = vmatpush.msra.mxu0 0.0
    %529 = vmatpush.msra.mxu0 0.0
    %530 = vmatpush.msra.mxu0 0.0
    %531 = vmatpush.msra.mxu0 0.0
    %532 = vmatpush.msra.mxu0 0.0
    %533 = vmatpush.msra.mxu0 0.0
    %534 = vmatpush.msra.mxu0 0.0
    %535 = vmatpush.msra.mxu0 0.0
    %536 = vmatpush.msra.mxu0 0.0
    %537 = vmatpush.msra.mxu0 0.0
    %538 = vmatpush.msra.mxu0 %v168
    %539 = vmatpush.msra.mxu0 %v167
    %540 = vmatpush.msra.mxu0 %v166
    %541 = vmatpush.msra.mxu0 %v165
    %542 = vmatmul.f32.gmra.mxu0 %v524
    %v543 = vpop.f32.mrf.mxu0
    %v544 = vadd.f32 %v171, %v543
    %545 = vdwg.mxu0
    %v546 = vadd.f32 %v157, %v544
    %v547 = vxor.u32 %v546, 2147483648
    %v548 = vmul.f32 %v547, 1.442695
    %v549 = vpow.pop %v548
    %v550 = vadd.f32 %v549, 1.0
    %v551 = vrcp.pop %v550
    %v552 = vmul.f32 %v550, %v551
    %v553 = vsub.f32 1.0, %v552
    %v554 = vmul.f32 %v551, %v553
    %v555 = vadd.f32 %v551, %v554
    %vm556 = vweird.f32 %v550
    %vm557 = vweird.f32 %v551
    %vm558 = vmor %vm556, %vm557
    %v559 = vsel %vm558, %v551, %v555
    %v560 = vand.u32 2147483647, %v550
    %vm561 = vcmp.eq.f32.partialorder %v560, 8.507059e+37
    %v562 = vand.u32 %v550, 2147483648
    %v563 = vor.u32 1.1754944e-38, %v562
    %v564 = vsel %vm561, %v563, %v559
    %v565 = vmul.f32 1.0, %v564
    %567 = vrot.lane.b32.xlu0 %v544, 64
    %v568 = vpop.permute.xlu0 %567
    %v570 = vmul.f32 %v565, %v568
    %572 = vrot.lane.b32.xlu0 %v570, 64
    %v573 = vpop.permute.xlu0 %572
    %v575 = vadd.f32 %v157, %v573
    %v576 = vtanh.pop %v575
    %v577 = vsub.f32 %v517, %v576
    %579 = vrot.lane.b32.xlu0 %v577, 96
    %v580 = vpop.permute.xlu0 %579
    %v582 = vmul.f32 %v565, %v580
    %584 = vrot.lane.b32.xlu0 %v582, 32
    %v585 = vpop.permute.xlu0 %584
    %v587 = vadd.f32 %v576, %v585
    %589 = vrot.lane.b32.xlu0 %v587, 64
    %v590 = vpop.permute.xlu0 %589
    %s592 = scalar_lea.vmem [#allocation5], 40
    %593 = vst.msk [vmem:[%s592] sm:$0xff] %vm173, %v590
    %v594 = vsel %vm173, %v590, 0
    %596 = vmatpush.msra.mxu0 0.0
    %597 = vmatpush.msra.mxu0 0.0
    %598 = vmatpush.msra.mxu0 0.0
    %599 = vmatpush.msra.mxu0 0.0
    %600 = vmatpush.msra.mxu0 0.0
    %601 = vmatpush.msra.mxu0 0.0
    %602 = vmatpush.msra.mxu0 0.0
    %603 = vmatpush.msra.mxu0 0.0
    %604 = vmatpush.msra.mxu0 0.0
    %605 = vmatpush.msra.mxu0 0.0
    %606 = vmatpush.msra.mxu0 0.0
    %607 = vmatpush.msra.mxu0 0.0
    %608 = vmatpush.msra.mxu0 %v168
    %609 = vmatpush.msra.mxu0 %v167
    %610 = vmatpush.msra.mxu0 %v166
    %611 = vmatpush.msra.mxu0 %v165
    %612 = vmatmul.f32.gmra.mxu0 %v594
    %v613 = vpop.f32.mrf.mxu0
    %v614 = vadd.f32 %v171, %v613
    %615 = vdwg.mxu0
    %v616 = vadd.f32 %v160, %v614
    %v617 = vxor.u32 %v616, 2147483648
    %v618 = vmul.f32 %v617, 1.442695
    %v619 = vpow.pop %v618
    %v620 = vadd.f32 %v619, 1.0
    %v621 = vrcp.pop %v620
    %v622 = vmul.f32 %v620, %v621
    %v623 = vsub.f32 1.0, %v622
    %v624 = vmul.f32 %v621, %v623
    %v625 = vadd.f32 %v621, %v624
    %vm626 = vweird.f32 %v620
    %vm627 = vweird.f32 %v621
    %vm628 = vmor %vm626, %vm627
    %v629 = vsel %vm628, %v621, %v625
    %v630 = vand.u32 2147483647, %v620
    %vm631 = vcmp.eq.f32.partialorder %v630, 8.507059e+37
    %v632 = vand.u32 %v620, 2147483648
    %v633 = vor.u32 1.1754944e-38, %v632
    %v634 = vsel %vm631, %v633, %v629
    %v635 = vmul.f32 1.0, %v634
    %637 = vrot.lane.b32.xlu0 %v614, 64
    %v638 = vpop.permute.xlu0 %637
    %v640 = vmul.f32 %v635, %v638
    %642 = vrot.lane.b32.xlu0 %v640, 64
    %v643 = vpop.permute.xlu0 %642
    %v645 = vadd.f32 %v160, %v643
    %v646 = vtanh.pop %v645
    %v647 = vsub.f32 %v587, %v646
    %649 = vrot.lane.b32.xlu0 %v647, 96
    %v650 = vpop.permute.xlu0 %649
    %v652 = vmul.f32 %v635, %v650
    %654 = vrot.lane.b32.xlu0 %v652, 32
    %v655 = vpop.permute.xlu0 %654
    %v657 = vadd.f32 %v646, %v655
    %659 = vrot.lane.b32.xlu0 %v657, 64
    %v660 = vpop.permute.xlu0 %659
    %s662 = scalar_lea.vmem [#allocation5], 48
    %663 = vst.msk [vmem:[%s662] sm:$0xff] %vm173, %v660
    %v664 = vsel %vm173, %v660, 0
    %666 = vmatpush.msra.mxu0 0.0
    %667 = vmatpush.msra.mxu0 0.0
    %668 = vmatpush.msra.mxu0 0.0
    %669 = vmatpush.msra.mxu0 0.0
    %670 = vmatpush.msra.mxu0 0.0
    %671 = vmatpush.msra.mxu0 0.0
    %672 = vmatpush.msra.mxu0 0.0
    %673 = vmatpush.msra.mxu0 0.0
    %674 = vmatpush.msra.mxu0 0.0
    %675 = vmatpush.msra.mxu0 0.0
    %676 = vmatpush.msra.mxu0 0.0
    %677 = vmatpush.msra.mxu0 0.0
    %678 = vmatpush.msra.mxu0 %v168
    %679 = vmatpush.msra.mxu0 %v167
    %680 = vmatpush.msra.mxu0 %v166
    %681 = vmatpush.msra.mxu0 %v165
    %682 = vmatmul.f32.gmra.mxu0 %v664
    %v683 = vpop.f32.mrf.mxu0
    %v684 = vadd.f32 %v171, %v683
    %685 = vdwg.mxu0
    %v686 = vadd.f32 %v163, %v684
    %v687 = vxor.u32 %v686, 2147483648
    %v688 = vmul.f32 %v687, 1.442695
    %v689 = vpow.pop %v688
    %v690 = vadd.f32 %v689, 1.0
    %v691 = vrcp.pop %v690
    %v692 = vmul.f32 %v690, %v691
    %v693 = vsub.f32 1.0, %v692
    %v694 = vmul.f32 %v691, %v693
    %v695 = vadd.f32 %v691, %v694
    %vm696 = vweird.f32 %v690
    %vm697 = vweird.f32 %v691
    %vm698 = vmor %vm696, %vm697
    %v699 = vsel %vm698, %v691, %v695
    %v700 = vand.u32 2147483647, %v690
    %vm701 = vcmp.eq.f32.partialorder %v700, 8.507059e+37
    %v702 = vand.u32 %v690, 2147483648
    %v703 = vor.u32 1.1754944e-38, %v702
    %v704 = vsel %vm701, %v703, %v699
    %v705 = vmul.f32 1.0, %v704
    %707 = vrot.lane.b32.xlu0 %v684, 64
    %v708 = vpop.permute.xlu0 %707
    %v710 = vmul.f32 %v705, %v708
    %712 = vrot.lane.b32.xlu0 %v710, 64
    %v713 = vpop.permute.xlu0 %712
    %v715 = vadd.f32 %v163, %v713
    %v716 = vtanh.pop %v715
    %v717 = vsub.f32 %v657, %v716
    %719 = vrot.lane.b32.xlu0 %v717, 96
    %v720 = vpop.permute.xlu0 %719
    %v722 = vmul.f32 %v705, %v720
    %724 = vrot.lane.b32.xlu0 %v722, 32
    %v725 = vpop.permute.xlu0 %724
    %v727 = vadd.f32 %v716, %v725
    %729 = vrot.lane.b32.xlu0 %v727, 64
    %v730 = vpop.permute.xlu0 %729
    %s732 = scalar_lea.vmem [#allocation5], 56
    %733 = vst.msk [vmem:[%s732] sm:$0xff] %vm173, %v730
    // Predicated region
    $region22: #{tpu_custom_call.1} parent=1 // pred_check
      _
    $region23: #{tpu_custom_call.1} parent=1 // pred_check_branch
      %735 = sbr.rel (0) target = $region25
    $region24: #{tpu_custom_call.1} parent=1 // pred_region
      %737 = vsyncadd [#allocation4], 0
      %s738 = sshll.u32 [#allocation5], 4
      %s739 = int_to_ptr.vmem [resolvable:$true] %s738
      %s740 = sshll.u32 %s4, 4
      %s741 = int_to_ptr.hbm [resolvable:$true] %s740
      %746 = dma.vmem_to_hbm [thread:$0]  %s739, 1024, %s741, [#allocation4], 128, 128, 8
    $region25: #{tpu_custom_call.1} parent=1 // pred_fallthru
      _
    // Predicated region
    $region26: #{tpu_custom_call.1} parent=1 // pred_check
      _
    $region27: #{tpu_custom_call.1} parent=1 // pred_check_branch
      %748 = sbr.rel (0) target = $region29
    $region28: #{tpu_custom_call.1} parent=1 // pred_region
      %750 = dma.done [#allocation4], 1024
    $region29: #{tpu_custom_call.1} parent=1 // pred_fallthru
      _
    %751 = vsyncpa [#allocation3], 1
    %752 = vsyncpa [#allocation4], 1

</llo_original>
